<compile_context>
chip_gen: v6e
topology: v6e:2x2x1
jax: 0.10.0
libtpu: 0.0.40
codegen_flags: <defaults>
</compile_context>

<pallas_src>
import jax
import jax.numpy as jnp
from jax import lax
from jax.experimental import pallas as pl
from jax.experimental.pallas import tpu as pltpu


def _softplus(u):
    # numerically stable softplus
    return jnp.maximum(u, 0.0) + jnp.log1p(jnp.exp(-jnp.abs(u)))


def _round_up(n, m):
    return ((n + m - 1) // m) * m


def _make_icnn_kernel(num_layers, compute_dtype):
    """Kernel ref order: x, W0, b0, (W1, b1, spU0), (W2, b2, spU1), ..., out.

    x      : (TB, D)        compute_dtype   (batch tile, features)
    W_i    : (L_i, D)       compute_dtype
    b_i    : (L_i, 1)       float32
    spU_i  : (L_i, L_{i-1}) compute_dtype   (softplus already applied)
    out    : (L_last, TB)   float32
    """
    # contract over D (axis 1 of both W and x) -> (L, TB); avoids transposing x
    dnums = (((1,), (1,)), ((), ()))

    def kernel(*refs):
        x_ref = refs[0]
        out_ref = refs[-1]
        params = refs[1:-1]

        x = x_ref[...]                                         # (TB, D)

        z = jnp.maximum(
            lax.dot_general(params[0][...], x, dnums,
                            preferred_element_type=jnp.float32)
            + params[1][...],
            0.0,
        )                                                      # (L0, TB) f32

        idx = 2
        for _ in range(num_layers - 1):
            w = params[idx][...]                               # (Li, D)
            b = params[idx + 1][...]                           # (Li, 1)
            u_sp = params[idx + 2][...]                        # (Li, L_{i-1})
            idx += 3
            wx = lax.dot_general(w, x, dnums,
                                 preferred_element_type=jnp.float32)
            uz = jnp.dot(u_sp, z.astype(compute_dtype),
                         preferred_element_type=jnp.float32)
            z = jnp.maximum(wx + b + uz, 0.0)

        out_ref[...] = z.astype(out_ref.dtype)

    return kernel


def icnn_forward(x, ws, bs, us, *, batch_tile=512, compute_dtype=jnp.float32):
    """x: (B, D).  ws/bs/us: lists of parameter arrays (PyTorch layout).

    Returns z of shape (L_last, B) — same orientation as the PyTorch module.
    """
    num_layers = len(ws)
    assert len(bs) == num_layers and len(us) == num_layers - 1
    # TODO(synk): unbatched 1-D inputs (PyTorch's unsqueeze(0) path) not supported.
    assert x.ndim == 2, "expects x of shape (batch, features)"

    B, D = x.shape
    layer_sizes = [int(w.shape[0]) for w in ws]
    l_last = layer_sizes[-1]

    # Lane-dense batch tile: multiple of 128, no bigger than needed.
    tb = _round_up(min(batch_tile, _round_up(B, 128)), 128)
    b_pad = _round_up(B, tb)

    x_p = x.astype(compute_dtype)
    if b_pad != B:
        x_p = jnp.pad(x_p, ((0, b_pad - B), (0, 0)))

    # Param prep (glue, done once per call, param-sized):
    #  - softplus(U) hoisted out of the per-tile path,
    #  - weights / U in compute dtype, biases stay f32 (added to f32 accum).
    ws_c = [w.astype(compute_dtype) for w in ws]
    bs_f = [b.astype(jnp.float32) for b in bs]
    us_sp = [_softplus(u.astype(jnp.float32)).astype(compute_dtype) for u in us]

    inputs = [x_p, ws_c[0], bs_f[0]]
    for i in range(num_layers - 1):
        inputs += [ws_c[i + 1], bs_f[i + 1], us_sp[i]]

    n_tiles = b_pad // tb
    grid = (n_tiles,)

    # x / out stream over the batch grid; every parameter stays resident.
    in_specs = [pl.BlockSpec((tb, D), lambda i: (i, 0))]
    in_specs += [pl.BlockSpec(tuple(p.shape), lambda i: (0, 0))
                 for p in inputs[1:]]
    out_specs = pl.BlockSpec((l_last, tb), lambda i: (0, i))

    # Explicit VMEM budget: double-buffered streaming tiles + resident params
    # (double-buffered by the pipeliner too) + a few f32 layer temporaries.
    cbytes = jnp.dtype(compute_dtype).itemsize
    l_max = max(layer_sizes)
    est = 2 * (tb * D * cbytes + l_last * tb * 4)
    est += 2 * sum(int(p.size) * p.dtype.itemsize for p in inputs[1:])
    est += 4 * l_max * tb * 4
    vmem_limit = min(max(int(1.5 * est) + (4 << 20), 16 << 20), 64 << 20)

    # Cost hint for the XLA scheduler (per full call, all tiles).
    flops = 0
    bytes_accessed = x_p.size * cbytes + l_last * b_pad * 4
    for i, li in enumerate(layer_sizes):
        flops += 2 * li * D * b_pad
        if i > 0:
            flops += 2 * li * layer_sizes[i - 1] * b_pad
    bytes_accessed += sum(int(p.size) * p.dtype.itemsize for p in inputs[1:])
    cost = pl.CostEstimate(flops=flops, transcendentals=0,
                           bytes_accessed=bytes_accessed)

    out = pl.pallas_call(
        _make_icnn_kernel(num_layers, compute_dtype),
        out_shape=jax.ShapeDtypeStruct((l_last, b_pad), jnp.float32),
        grid=grid,
        in_specs=in_specs,
        out_specs=out_specs,
        compiler_params=pltpu.CompilerParams(
            dimension_semantics=("parallel",),
            vmem_limit_bytes=vmem_limit,
        ),
        cost_estimate=cost,
    )(*inputs)

    return out[:, :B]


def _xavier_normal(key, shape):
    # matches nn.init.xavier_normal_ for 2-D tensors
    fan_out, fan_in = shape
    std = (2.0 / (fan_in + fan_out)) ** 0.5
    return std * jax.random.normal(key, shape, dtype=jnp.float32)


def init_icnn_params(key, input_dim, layer_sizes):
    ws, bs, us = [], [], []
    keys = jax.random.split(key, 3 * len(layer_sizes))
    k = iter(keys)
    ws.append(_xavier_normal(next(k), (layer_sizes[0], input_dim)))
    bs.append(_xavier_normal(next(k), (layer_sizes[0], 1)))
    for i in range(1, len(layer_sizes)):
        ws.append(_xavier_normal(next(k), (layer_sizes[i], input_dim)))
        bs.append(_xavier_normal(next(k), (layer_sizes[i], 1)))
        us.append(_xavier_normal(next(k), (layer_sizes[i], layer_sizes[i - 1])))
    return ws, bs, us


def icnn_reference(x, ws, bs, us):
    """Pure-JAX reference matching the PyTorch forward."""
    x_t = x.T
    z = jnp.maximum(ws[0] @ x_t + bs[0], 0.0)
    for i in range(len(us)):
        z = jnp.maximum(ws[i + 1] @ x_t + bs[i + 1] + _softplus(us[i]) @ z, 0.0)
    return z


if __name__ == "__main__":
    key = jax.random.PRNGKey(0)
    k_x, k_p = jax.random.split(key)

    batch = 200                      # not a multiple of 128 -> exercises padding
    input_dim = 64
    layer_sizes = [128, 128, 64]

    x = jax.random.normal(k_x, (batch, input_dim), dtype=jnp.float32)
    ws, bs, us = init_icnn_params(k_p, input_dim, layer_sizes)

    ref = icnn_reference(x, ws, bs, us)

    # f32 compute path: tight check against the pure-JAX reference.
    out = jax.block_until_ready(icnn_forward(x, ws, bs, us))
    assert out.shape == (layer_sizes[-1], batch)
    assert jnp.allclose(out, ref, atol=1e-4, rtol=1e-4), float(
        jnp.max(jnp.abs(out - ref)))

    # bf16 weights / activations with f32 MXU accumulation (v6e/v7x fast path).
    out_bf16 = jax.block_until_ready(
        icnn_forward(x, ws, bs, us, compute_dtype=jnp.bfloat16))
    assert out_bf16.shape == (layer_sizes[-1], batch)
    rel_err = jnp.max(jnp.abs(out_bf16 - ref)) / (jnp.max(jnp.abs(ref)) + 1e-6)
    assert float(rel_err) < 8e-2, float(rel_err)

    print("KERNEL_OK")
</pallas_src>

<mosaic_0001>
module attributes {stable_mosaic.version = 11 : i64} {
  func.func @kernel(%arg0: i32, %arg1: memref<256x64xf32, #tpu.memory_space<vmem>>, %arg2: memref<128x64xf32, #tpu.memory_space<vmem>>, %arg3: memref<128x1xf32, #tpu.memory_space<vmem>>, %arg4: memref<128x64xf32, #tpu.memory_space<vmem>>, %arg5: memref<128x1xf32, #tpu.memory_space<vmem>>, %arg6: memref<128x128xf32, #tpu.memory_space<vmem>>, %arg7: memref<64x64xf32, #tpu.memory_space<vmem>>, %arg8: memref<64x1xf32, #tpu.memory_space<vmem>>, %arg9: memref<64x128xf32, #tpu.memory_space<vmem>>, %arg10: memref<64x256xf32, #tpu.memory_space<vmem>>) attributes {dimension_semantics = [#tpu.dimension_semantics<parallel>], iteration_bounds = array<i64: 1>, scalar_prefetch = 0 : i64, scratch_operands = 0 : i64, tpu.core_type = #tpu.core_type<tc>, window_params = [{transform_indices = @transform_0, window_bounds = array<i64: 256, 64>}, {pipeline_mode = #tpu.pipeline_mode<synchronous>, transform_indices = @transform_1, window_bounds = array<i64: 128, 64>}, {pipeline_mode = #tpu.pipeline_mode<synchronous>, transform_indices = @transform_2, window_bounds = array<i64: 128, 1>}, {pipeline_mode = #tpu.pipeline_mode<synchronous>, transform_indices = @transform_3, window_bounds = array<i64: 128, 64>}, {pipeline_mode = #tpu.pipeline_mode<synchronous>, transform_indices = @transform_4, window_bounds = array<i64: 128, 1>}, {pipeline_mode = #tpu.pipeline_mode<synchronous>, transform_indices = @transform_5, window_bounds = array<i64: 128, 128>}, {pipeline_mode = #tpu.pipeline_mode<synchronous>, transform_indices = @transform_6, window_bounds = array<i64: 64, 64>}, {pipeline_mode = #tpu.pipeline_mode<synchronous>, transform_indices = @transform_7, window_bounds = array<i64: 64, 1>}, {pipeline_mode = #tpu.pipeline_mode<synchronous>, transform_indices = @transform_8, window_bounds = array<i64: 64, 128>}, {transform_indices = @transform_9, window_bounds = array<i64: 64, 256>}]} {
    %c0 = arith.constant 0 : index
    %c0_0 = arith.constant 0 : index
    %0 = vector.load %arg1[%c0, %c0_0] : memref<256x64xf32, #tpu.memory_space<vmem>>, vector<256x64xf32>
    %c0_1 = arith.constant 0 : index
    %c0_2 = arith.constant 0 : index
    %1 = vector.load %arg2[%c0_1, %c0_2] : memref<128x64xf32, #tpu.memory_space<vmem>>, vector<128x64xf32>
    %cst = arith.constant dense<0.000000e+00> : vector<128x256xf32>
    %2 = tpu.matmul %1, %0, %cst {dimension_numbers = #tpu.dot_dimension_numbers<[1], [1], [0], [0], [0, 0, 1, 0], [], []>} : vector<128x64xf32>, vector<256x64xf32>, vector<128x256xf32> -> vector<128x256xf32>
    %c0_3 = arith.constant 0 : index
    %c0_4 = arith.constant 0 : index
    %3 = vector.load %arg3[%c0_3, %c0_4] : memref<128x1xf32, #tpu.memory_space<vmem>>, vector<128x1xf32>
    %4 = vector.broadcast %3 : vector<128x1xf32> to vector<128x256xf32>
    %5 = arith.addf %2, %4 : vector<128x256xf32>
    %cst_5 = arith.constant 0.000000e+00 : f32
    %6 = vector.broadcast %cst_5 : f32 to vector<128x256xf32>
    %7 = arith.maximumf %5, %6 : vector<128x256xf32>
    %c0_6 = arith.constant 0 : index
    %c0_7 = arith.constant 0 : index
    %8 = vector.load %arg4[%c0_6, %c0_7] : memref<128x64xf32, #tpu.memory_space<vmem>>, vector<128x64xf32>
    %c0_8 = arith.constant 0 : index
    %c0_9 = arith.constant 0 : index
    %9 = vector.load %arg5[%c0_8, %c0_9] : memref<128x1xf32, #tpu.memory_space<vmem>>, vector<128x1xf32>
    %c0_10 = arith.constant 0 : index
    %c0_11 = arith.constant 0 : index
    %10 = vector.load %arg6[%c0_10, %c0_11] : memref<128x128xf32, #tpu.memory_space<vmem>>, vector<128x128xf32>
    %cst_12 = arith.constant dense<0.000000e+00> : vector<128x256xf32>
    %11 = tpu.matmul %8, %0, %cst_12 {dimension_numbers = #tpu.dot_dimension_numbers<[1], [1], [0], [0], [0, 0, 1, 0], [], []>} : vector<128x64xf32>, vector<256x64xf32>, vector<128x256xf32> -> vector<128x256xf32>
    %cst_13 = arith.constant dense<0.000000e+00> : vector<128x256xf32>
    %12 = tpu.matmul %10, %7, %cst_13 {dimension_numbers = #tpu.dot_dimension_numbers<[1], [0], [0], [1], [0, 0, 1, 1], [], []>} : vector<128x128xf32>, vector<128x256xf32>, vector<128x256xf32> -> vector<128x256xf32>
    %13 = vector.broadcast %9 : vector<128x1xf32> to vector<128x256xf32>
    %14 = arith.addf %11, %13 : vector<128x256xf32>
    %15 = arith.addf %14, %12 : vector<128x256xf32>
    %cst_14 = arith.constant 0.000000e+00 : f32
    %16 = vector.broadcast %cst_14 : f32 to vector<128x256xf32>
    %17 = arith.maximumf %15, %16 : vector<128x256xf32>
    %c0_15 = arith.constant 0 : index
    %c0_16 = arith.constant 0 : index
    %18 = vector.load %arg7[%c0_15, %c0_16] : memref<64x64xf32, #tpu.memory_space<vmem>>, vector<64x64xf32>
    %c0_17 = arith.constant 0 : index
    %c0_18 = arith.constant 0 : index
    %19 = vector.load %arg8[%c0_17, %c0_18] : memref<64x1xf32, #tpu.memory_space<vmem>>, vector<64x1xf32>
    %c0_19 = arith.constant 0 : index
    %c0_20 = arith.constant 0 : index
    %20 = vector.load %arg9[%c0_19, %c0_20] : memref<64x128xf32, #tpu.memory_space<vmem>>, vector<64x128xf32>
    %cst_21 = arith.constant dense<0.000000e+00> : vector<64x256xf32>
    %21 = tpu.matmul %18, %0, %cst_21 {dimension_numbers = #tpu.dot_dimension_numbers<[1], [1], [0], [0], [0, 0, 1, 0], [], []>} : vector<64x64xf32>, vector<256x64xf32>, vector<64x256xf32> -> vector<64x256xf32>
    %cst_22 = arith.constant dense<0.000000e+00> : vector<64x256xf32>
    %22 = tpu.matmul %20, %17, %cst_22 {dimension_numbers = #tpu.dot_dimension_numbers<[1], [0], [0], [1], [0, 0, 1, 1], [], []>} : vector<64x128xf32>, vector<128x256xf32>, vector<64x256xf32> -> vector<64x256xf32>
    %23 = vector.broadcast %19 : vector<64x1xf32> to vector<64x256xf32>
    %24 = arith.addf %21, %23 : vector<64x256xf32>
    %25 = arith.addf %24, %22 : vector<64x256xf32>
    %cst_23 = arith.constant 0.000000e+00 : f32
    %26 = vector.broadcast %cst_23 : f32 to vector<64x256xf32>
    %27 = arith.maximumf %25, %26 : vector<64x256xf32>
    %c0_24 = arith.constant 0 : index
    %c0_25 = arith.constant 0 : index
    %28 = vector.load %arg10[%c0_24, %c0_25] : memref<64x256xf32, #tpu.memory_space<vmem>>, vector<64x256xf32>
    tpu.vector_store %arg10[%c0_24, %c0_25], %27 {strides = array<i32>} : memref<64x256xf32, #tpu.memory_space<vmem>>, vector<64x256xf32>,
    return
  }
  func.func @transform_0(%arg0: i32) -> (i32, i32) {
    %c0_i32 = arith.constant 0 : i32
    %c0_i32_0 = arith.constant 0 : i32
    return %arg0, %c0_i32 : i32, i32
  }
  func.func @transform_1(%arg0: i32) -> (i32, i32) {
    %c0_i32 = arith.constant 0 : i32
    %c0_i32_0 = arith.constant 0 : i32
    %c0_i32_1 = arith.constant 0 : i32
    return %c0_i32, %c0_i32_0 : i32, i32
  }
  func.func @transform_2(%arg0: i32) -> (i32, i32) {
    %c0_i32 = arith.constant 0 : i32
    %c0_i32_0 = arith.constant 0 : i32
    %c0_i32_1 = arith.constant 0 : i32
    return %c0_i32, %c0_i32_0 : i32, i32
  }
  func.func @transform_3(%arg0: i32) -> (i32, i32) {
    %c0_i32 = arith.constant 0 : i32
    %c0_i32_0 = arith.constant 0 : i32
    %c0_i32_1 = arith.constant 0 : i32
    return %c0_i32, %c0_i32_0 : i32, i32
  }
  func.func @transform_4(%arg0: i32) -> (i32, i32) {
    %c0_i32 = arith.constant 0 : i32
    %c0_i32_0 = arith.constant 0 : i32
    %c0_i32_1 = arith.constant 0 : i32
    return %c0_i32, %c0_i32_0 : i32, i32
  }
  func.func @transform_5(%arg0: i32) -> (i32, i32) {
    %c0_i32 = arith.constant 0 : i32
    %c0_i32_0 = arith.constant 0 : i32
    %c0_i32_1 = arith.constant 0 : i32
    return %c0_i32, %c0_i32_0 : i32, i32
  }
  func.func @transform_6(%arg0: i32) -> (i32, i32) {
    %c0_i32 = arith.constant 0 : i32
    %c0_i32_0 = arith.constant 0 : i32
    %c0_i32_1 = arith.constant 0 : i32
    return %c0_i32, %c0_i32_0 : i32, i32
  }
  func.func @transform_7(%arg0: i32) -> (i32, i32) {
    %c0_i32 = arith.constant 0 : i32
    %c0_i32_0 = arith.constant 0 : i32
    %c0_i32_1 = arith.constant 0 : i32
    return %c0_i32, %c0_i32_0 : i32, i32
  }
  func.func @transform_8(%arg0: i32) -> (i32, i32) {
    %c0_i32 = arith.constant 0 : i32
    %c0_i32_0 = arith.constant 0 : i32
    %c0_i32_1 = arith.constant 0 : i32
    return %c0_i32, %c0_i32_0 : i32, i32
  }
  func.func @transform_9(%arg0: i32) -> (i32, i32) {
    %c0_i32 = arith.constant 0 : i32
    %c0_i32_0 = arith.constant 0 : i32
    return %c0_i32, %arg0 : i32, i32
  }
}

</mosaic_0001>

<llo_original>
// kernel: tpu_custom_call.1
$region0: #{tpu_custom_call.1}
  #allocation0 [shape = 'u32[]', space=smem, size = 0x4, offset = 0x4, fixed_abs, tag = 'smem constant byte address 0x4 - core index']
  #allocation1 [shape = 'u32[144,128]{1,0:T(1,128)}', space=vmem, size = 0x12000, scoped, tag = 'internal scratch']
  %s0 = inlined_call_operand.vmem [shape: f32[256,64], index: 0, kind: input, shape index: {}]
  %s1 = inlined_call_operand.vmem [shape: f32[128,64], index: 1, kind: input, shape index: {}]
  %s2 = inlined_call_operand.vmem [shape: f32[128,1], index: 2, kind: input, shape index: {}]
  %s3 = inlined_call_operand.vmem [shape: f32[128,64], index: 3, kind: input, shape index: {}]
  %s4 = inlined_call_operand.vmem [shape: f32[128,1], index: 4, kind: input, shape index: {}]
  %s5 = inlined_call_operand.vmem [shape: f32[128,128], index: 5, kind: input, shape index: {}]
  %s6 = inlined_call_operand.vmem [shape: f32[64,64], index: 6, kind: input, shape index: {}]
  %s7 = inlined_call_operand.vmem [shape: f32[64,1], index: 7, kind: input, shape index: {}]
  %s8 = inlined_call_operand.vmem [shape: f32[64,128], index: 8, kind: input, shape index: {}]
  %s9 = inlined_call_operand.hbm [shape: f32[64,256], index: 9, kind: output, shape index: {}]
  %s10 = sld [smem:[#allocation0]]
  $region46: #{tpu_custom_call.1} parent=0
    _
  %s12 = ssub.s32 1, %s10
  %s13 = scalar_select 0, %s12, %s10
  $region1: #{tpu_custom_call.1} parent=0
    #allocation2 [shape = 'u8[65536]{0}', space=vmem, size = 0x10000, scoped, tag = 'output window, operand 0, single buffered']
    #allocation3 [shape = 's32[1]{0}', space=sflag, size = 0x4, scoped, tag = 'scoped memory for tpu_custom_call.1']
    %14 = vsyncpa [#allocation3], 0
    // Predicated region
    $region2: #{tpu_custom_call.1} parent=1 // pred_check
      _
    $region3: #{tpu_custom_call.1} parent=1 // pred_check_branch
      %16 = sbr.rel (0) target = $region5
    $region4: #{tpu_custom_call.1} parent=1 // pred_region
      _
    $region5: #{tpu_custom_call.1} parent=1 // pred_fallthru
      _
    // Predicated region
    $region6: #{tpu_custom_call.1} parent=1 // pred_check
      _
    $region7: #{tpu_custom_call.1} parent=1 // pred_check_branch
      %18 = sbr.rel (0) target = $region9
    $region8: #{tpu_custom_call.1} parent=1 // pred_region
      _
    $region9: #{tpu_custom_call.1} parent=1 // pred_fallthru
      _
    // Predicated region
    $region10: #{tpu_custom_call.1} parent=1 // pred_check
      _
    $region11: #{tpu_custom_call.1} parent=1 // pred_check_branch
      %20 = sbr.rel (0) target = $region13
    $region12: #{tpu_custom_call.1} parent=1 // pred_region
      _
    $region13: #{tpu_custom_call.1} parent=1 // pred_fallthru
      _
    // Predicated region
    $region14: #{tpu_custom_call.1} parent=1 // pred_check
      _
    $region15: #{tpu_custom_call.1} parent=1 // pred_check_branch
      %22 = sbr.rel (0) target = $region17
    $region16: #{tpu_custom_call.1} parent=1 // pred_region
      _
    $region17: #{tpu_custom_call.1} parent=1 // pred_fallthru
      _
    // Predicated region
    $region18: #{tpu_custom_call.1} parent=1 // pred_check
      _
    $region19: #{tpu_custom_call.1} parent=1 // pred_check_branch
      %24 = sbr.rel (0) target = $region21
    $region20: #{tpu_custom_call.1} parent=1 // pred_region
      _
    $region21: #{tpu_custom_call.1} parent=1 // pred_fallthru
      _
    // Predicated region
    $region22: #{tpu_custom_call.1} parent=1 // pred_check
      _
    $region23: #{tpu_custom_call.1} parent=1 // pred_check_branch
      %26 = sbr.rel (0) target = $region25
    $region24: #{tpu_custom_call.1} parent=1 // pred_region
      _
    $region25: #{tpu_custom_call.1} parent=1 // pred_fallthru
      _
    // Predicated region
    $region26: #{tpu_custom_call.1} parent=1 // pred_check
      _
    $region27: #{tpu_custom_call.1} parent=1 // pred_check_branch
      %28 = sbr.rel (0) target = $region29
    $region28: #{tpu_custom_call.1} parent=1 // pred_region
      _
    $region29: #{tpu_custom_call.1} parent=1 // pred_fallthru
      _
    // Predicated region
    $region30: #{tpu_custom_call.1} parent=1 // pred_check
      _
    $region31: #{tpu_custom_call.1} parent=1 // pred_check_branch
      %30 = sbr.rel (0) target = $region33
    $region32: #{tpu_custom_call.1} parent=1 // pred_region
      _
    $region33: #{tpu_custom_call.1} parent=1 // pred_fallthru
      _
    // Predicated region
    $region34: #{tpu_custom_call.1} parent=1 // pred_check
      _
    $region35: #{tpu_custom_call.1} parent=1 // pred_check_branch
      %32 = sbr.rel (0) target = $region37
    $region36: #{tpu_custom_call.1} parent=1 // pred_region
      _
    $region37: #{tpu_custom_call.1} parent=1 // pred_fallthru
      _
    %v33 = vld [vmem:[%s0] sm:$0xff]
    %v34 = vld [vmem:[%s0 + $0x8] sm:$0xff]
    %v35 = vld [vmem:[%s0 + $0x10] sm:$0xff]
    %v36 = vld [vmem:[%s0 + $0x18] sm:$0xff]
    %v37 = vld [vmem:[%s0 + $0x20] sm:$0xff]
    %v38 = vld [vmem:[%s0 + $0x28] sm:$0xff]
    %v39 = vld [vmem:[%s0 + $0x30] sm:$0xff]
    %v40 = vld [vmem:[%s0 + $0x38] sm:$0xff]
    %v41 = vld [vmem:[%s0 + $0x40] sm:$0xff]
    %v42 = vld [vmem:[%s0 + $0x48] sm:$0xff]
    %v43 = vld [vmem:[%s0 + $0x50] sm:$0xff]
    %v44 = vld [vmem:[%s0 + $0x58] sm:$0xff]
    %v45 = vld [vmem:[%s0 + $0x60] sm:$0xff]
    %v46 = vld [vmem:[%s0 + $0x68] sm:$0xff]
    %v47 = vld [vmem:[%s0 + $0x70] sm:$0xff]
    %v48 = vld [vmem:[%s0 + $0x78] sm:$0xff]
    %v49 = vld [vmem:[%s0 + $0x80] sm:$0xff]
    %v50 = vld [vmem:[%s0 + $0x88] sm:$0xff]
    %v51 = vld [vmem:[%s0 + $0x90] sm:$0xff]
    %v52 = vld [vmem:[%s0 + $0x98] sm:$0xff]
    %v53 = vld [vmem:[%s0 + $0xa0] sm:$0xff]
    %v54 = vld [vmem:[%s0 + $0xa8] sm:$0xff]
    %v55 = vld [vmem:[%s0 + $0xb0] sm:$0xff]
    %v56 = vld [vmem:[%s0 + $0xb8] sm:$0xff]
    %v57 = vld [vmem:[%s0 + $0xc0] sm:$0xff]
    %v58 = vld [vmem:[%s0 + $0xc8] sm:$0xff]
    %v59 = vld [vmem:[%s0 + $0xd0] sm:$0xff]
    %v60 = vld [vmem:[%s0 + $0xd8] sm:$0xff]
    %v61 = vld [vmem:[%s0 + $0xe0] sm:$0xff]
    %v62 = vld [vmem:[%s0 + $0xe8] sm:$0xff]
    %v63 = vld [vmem:[%s0 + $0xf0] sm:$0xff]
    %v64 = vld [vmem:[%s0 + $0xf8] sm:$0xff]
    %v65 = vld [vmem:[%s1] sm:$0xff]
    %v66 = vld [vmem:[%s1 + $0x8] sm:$0xff]
    %v67 = vld [vmem:[%s1 + $0x10] sm:$0xff]
    %v68 = vld [vmem:[%s1 + $0x18] sm:$0xff]
    %v69 = vld [vmem:[%s1 + $0x20] sm:$0xff]
    %v70 = vld [vmem:[%s1 + $0x28] sm:$0xff]
    %v71 = vld [vmem:[%s1 + $0x30] sm:$0xff]
    %v72 = vld [vmem:[%s1 + $0x38] sm:$0xff]
    %v73 = vld [vmem:[%s1 + $0x40] sm:$0xff]
    %v74 = vld [vmem:[%s1 + $0x48] sm:$0xff]
    %v75 = vld [vmem:[%s1 + $0x50] sm:$0xff]
    %v76 = vld [vmem:[%s1 + $0x58] sm:$0xff]
    %v77 = vld [vmem:[%s1 + $0x60] sm:$0xff]
    %v78 = vld [vmem:[%s1 + $0x68] sm:$0xff]
    %v79 = vld [vmem:[%s1 + $0x70] sm:$0xff]
    %v80 = vld [vmem:[%s1 + $0x78] sm:$0xff]
    %v81 = vld [vmem:[%s2] sm:$0xff]
    %v82 = vld [vmem:[%s2 + $0x8] sm:$0xff]
    %v83 = vld [vmem:[%s2 + $0x10] sm:$0xff]
    %v84 = vld [vmem:[%s2 + $0x18] sm:$0xff]
    %v85 = vld [vmem:[%s2 + $0x20] sm:$0xff]
    %v86 = vld [vmem:[%s2 + $0x28] sm:$0xff]
    %v87 = vld [vmem:[%s2 + $0x30] sm:$0xff]
    %v88 = vld [vmem:[%s2 + $0x38] sm:$0xff]
    %v89 = vld [vmem:[%s2 + $0x40] sm:$0xff]
    %v90 = vld [vmem:[%s2 + $0x48] sm:$0xff]
    %v91 = vld [vmem:[%s2 + $0x50] sm:$0xff]
    %v92 = vld [vmem:[%s2 + $0x58] sm:$0xff]
    %v93 = vld [vmem:[%s2 + $0x60] sm:$0xff]
    %v94 = vld [vmem:[%s2 + $0x68] sm:$0xff]
    %v95 = vld [vmem:[%s2 + $0x70] sm:$0xff]
    %v96 = vld [vmem:[%s2 + $0x78] sm:$0xff]
    %98 = vset.pattern.permute.xlu0 0
    %99 = vperm.xlu0 %98, %v81
    %v100 = vpop.permute.xlu0 %99
    %103 = vset.pattern.permute.xlu0 0
    %104 = vperm.xlu0 %103, %v82
    %v105 = vpop.permute.xlu0 %104
    %108 = vset.pattern.permute.xlu0 0
    %109 = vperm.xlu0 %108, %v83
    %v110 = vpop.permute.xlu0 %109
    %113 = vset.pattern.permute.xlu0 0
    %114 = vperm.xlu0 %113, %v84
    %v115 = vpop.permute.xlu0 %114
    %118 = vset.pattern.permute.xlu0 0
    %119 = vperm.xlu0 %118, %v85
    %v120 = vpop.permute.xlu0 %119
    %123 = vset.pattern.permute.xlu0 0
    %124 = vperm.xlu0 %123, %v86
    %v125 = vpop.permute.xlu0 %124
    %128 = vset.pattern.permute.xlu0 0
    %129 = vperm.xlu0 %128, %v87
    %v130 = vpop.permute.xlu0 %129
    %133 = vset.pattern.permute.xlu0 0
    %134 = vperm.xlu0 %133, %v88
    %v135 = vpop.permute.xlu0 %134
    %138 = vset.pattern.permute.xlu0 0
    %139 = vperm.xlu0 %138, %v89
    %v140 = vpop.permute.xlu0 %139
    %143 = vset.pattern.permute.xlu0 0
    %144 = vperm.xlu0 %143, %v90
    %v145 = vpop.permute.xlu0 %144
    %148 = vset.pattern.permute.xlu0 0
    %149 = vperm.xlu0 %148, %v91
    %v150 = vpop.permute.xlu0 %149
    %153 = vset.pattern.permute.xlu0 0
    %154 = vperm.xlu0 %153, %v92
    %v155 = vpop.permute.xlu0 %154
    %158 = vset.pattern.permute.xlu0 0
    %159 = vperm.xlu0 %158, %v93
    %v160 = vpop.permute.xlu0 %159
    %163 = vset.pattern.permute.xlu0 0
    %164 = vperm.xlu0 %163, %v94
    %v165 = vpop.permute.xlu0 %164
    %168 = vset.pattern.permute.xlu0 0
    %169 = vperm.xlu0 %168, %v95
    %v170 = vpop.permute.xlu0 %169
    %173 = vset.pattern.permute.xlu0 0
    %174 = vperm.xlu0 %173, %v96
    %v175 = vpop.permute.xlu0 %174
    %vm177 = vcmask 523264
    %v179 = vsel %vm177, %v65, 0
    %v182 = vsel %vm177, %v66, 0
    %v185 = vsel %vm177, %v67, 0
    %v188 = vsel %vm177, %v68, 0
    %v191 = vsel %vm177, %v69, 0
    %v194 = vsel %vm177, %v70, 0
    %v197 = vsel %vm177, %v71, 0
    %v200 = vsel %vm177, %v72, 0
    %v203 = vsel %vm177, %v73, 0
    %v206 = vsel %vm177, %v74, 0
    %v209 = vsel %vm177, %v75, 0
    %v212 = vsel %vm177, %v76, 0
    %v215 = vsel %vm177, %v77, 0
    %v218 = vsel %vm177, %v78, 0
    %v221 = vsel %vm177, %v79, 0
    %v224 = vsel %vm177, %v80, 0
    %v227 = vsel %vm177, %v33, 0
    %v230 = vsel %vm177, %v34, 0
    %v233 = vsel %vm177, %v35, 0
    %v236 = vsel %vm177, %v36, 0
    %v239 = vsel %vm177, %v37, 0
    %v242 = vsel %vm177, %v38, 0
    %v245 = vsel %vm177, %v39, 0
    %v248 = vsel %vm177, %v40, 0
    %v251 = vsel %vm177, %v41, 0
    %v254 = vsel %vm177, %v42, 0
    %v257 = vsel %vm177, %v43, 0
    %v260 = vsel %vm177, %v44, 0
    %v263 = vsel %vm177, %v45, 0
    %v266 = vsel %vm177, %v46, 0
    %v269 = vsel %vm177, %v47, 0
    %v272 = vsel %vm177, %v48, 0
    %v275 = vsel %vm177, %v49, 0
    %v278 = vsel %vm177, %v50, 0
    %v281 = vsel %vm177, %v51, 0
    %v284 = vsel %vm177, %v52, 0
    %v287 = vsel %vm177, %v53, 0
    %v290 = vsel %vm177, %v54, 0
    %v293 = vsel %vm177, %v55, 0
    %v296 = vsel %vm177, %v56, 0
    %v299 = vsel %vm177, %v57, 0
    %v302 = vsel %vm177, %v58, 0
    %v305 = vsel %vm177, %v59, 0
    %v308 = vsel %vm177, %v60, 0
    %v311 = vsel %vm177, %v61, 0
    %v314 = vsel %vm177, %v62, 0
    %v317 = vsel %vm177, %v63, 0
    %v320 = vsel %vm177, %v64, 0
    %322 = vmatprep.subr.mxu0 0.0
    %323 = vmatpush1.xpose.msra.mxu0 %v272
    %324 = vmatprep.subr.mxu0 0.0
    %325 = vmatpush1.xpose.msra.mxu0 %v269
    %326 = vmatprep.subr.mxu0 0.0
    %327 = vmatpush1.xpose.msra.mxu0 %v266
    %328 = vmatprep.subr.mxu0 0.0
    %329 = vmatpush1.xpose.msra.mxu0 %v263
    %330 = vmatprep.subr.mxu0 0.0
    %331 = vmatpush1.xpose.msra.mxu0 %v260
    %332 = vmatprep.subr.mxu0 0.0
    %333 = vmatpush1.xpose.msra.mxu0 %v257
    %334 = vmatprep.subr.mxu0 0.0
    %335 = vmatpush1.xpose.msra.mxu0 %v254
    %336 = vmatprep.subr.mxu0 0.0
    %337 = vmatpush1.xpose.msra.mxu0 %v251
    %338 = vmatprep.subr.mxu0 0.0
    %339 = vmatpush1.xpose.msra.mxu0 %v248
    %340 = vmatprep.subr.mxu0 0.0
    %341 = vmatpush1.xpose.msra.mxu0 %v245
    %342 = vmatprep.subr.mxu0 0.0
    %343 = vmatpush1.xpose.msra.mxu0 %v242
    %344 = vmatprep.subr.mxu0 0.0
    %345 = vmatpush1.xpose.msra.mxu0 %v239
    %346 = vmatprep.subr.mxu0 0.0
    %347 = vmatpush1.xpose.msra.mxu0 %v236
    %348 = vmatprep.subr.mxu0 0.0
    %349 = vmatpush1.xpose.msra.mxu0 %v233
    %350 = vmatprep.subr.mxu0 0.0
    %351 = vmatpush1.xpose.msra.mxu0 %v230
    %352 = vmatprep.subr.mxu0 0.0
    %353 = vmatpush1.xpose.msra.mxu0 %v227
    %354 = vmatprep.subr.mxu0 0.0
    %355 = vmatpush2.xpose.msra.mxu0 %v320
    %356 = vmatprep.subr.mxu0 0.0
    %357 = vmatpush2.xpose.msra.mxu0 %v317
    %358 = vmatprep.subr.mxu0 0.0
    %359 = vmatpush2.xpose.msra.mxu0 %v314
    %360 = vmatprep.subr.mxu0 0.0
    %361 = vmatpush2.xpose.msra.mxu0 %v311
    %362 = vmatprep.subr.mxu0 0.0
    %363 = vmatpush2.xpose.msra.mxu0 %v308
    %364 = vmatprep.subr.mxu0 0.0
    %365 = vmatpush2.xpose.msra.mxu0 %v305
    %366 = vmatprep.subr.mxu0 0.0
    %367 = vmatpush2.xpose.msra.mxu0 %v302
    %368 = vmatprep.subr.mxu0 0.0
    %369 = vmatpush2.xpose.msra.mxu0 %v299
    %370 = vmatprep.subr.mxu0 0.0
    %371 = vmatpush2.xpose.msra.mxu0 %v296
    %372 = vmatprep.subr.mxu0 0.0
    %373 = vmatpush2.xpose.msra.mxu0 %v293
    %374 = vmatprep.subr.mxu0 0.0
    %375 = vmatpush2.xpose.msra.mxu0 %v290
    %376 = vmatprep.subr.mxu0 0.0
    %377 = vmatpush2.xpose.msra.mxu0 %v287
    %378 = vmatprep.subr.mxu0 0.0
    %379 = vmatpush2.xpose.msra.mxu0 %v284
    %380 = vmatprep.subr.mxu0 0.0
    %381 = vmatpush2.xpose.msra.mxu0 %v281
    %382 = vmatprep.subr.mxu0 0.0
    %383 = vmatpush2.xpose.msra.mxu0 %v278
    %384 = vmatprep.subr.mxu0 0.0
    %385 = vmatpush2.xpose.msra.mxu0 %v275
    %386 = vmatprep.mubr.f32.mxu0 0.0
    %387 = vmatmul.mubr.f32.gmra.mxu0 %v179
    %v388 = vpop.f32.mrf.mxu0
    %v389 = vadd.f32 %v100, %v388
    %v390 = vpop.f32.mrf.mxu0
    %v391 = vadd.f32 %v100, %v390
    %392 = vmatprep.mubr.f32.mxu0 0.0
    %393 = vmatmul.mubr.f32.gmra.mxu0 %v182
    %v394 = vpop.f32.mrf.mxu0
    %v395 = vadd.f32 %v105, %v394
    %v396 = vpop.f32.mrf.mxu0
    %v397 = vadd.f32 %v105, %v396
    %398 = vmatprep.mubr.f32.mxu0 0.0
    %399 = vmatmul.mubr.f32.gmra.mxu0 %v185
    %v400 = vpop.f32.mrf.mxu0
    %v401 = vadd.f32 %v110, %v400
    %v402 = vpop.f32.mrf.mxu0
    %v403 = vadd.f32 %v110, %v402
    %404 = vmatprep.mubr.f32.mxu0 0.0
    %405 = vmatmul.mubr.f32.gmra.mxu0 %v188
    %v406 = vpop.f32.mrf.mxu0
    %v407 = vadd.f32 %v115, %v406
    %v408 = vpop.f32.mrf.mxu0
    %v409 = vadd.f32 %v115, %v408
    %410 = vmatprep.mubr.f32.mxu0 0.0
    %411 = vmatmul.mubr.f32.gmra.mxu0 %v191
    %v412 = vpop.f32.mrf.mxu0
    %v413 = vadd.f32 %v120, %v412
    %v414 = vpop.f32.mrf.mxu0
    %v415 = vadd.f32 %v120, %v414
    %416 = vmatprep.mubr.f32.mxu0 0.0
    %417 = vmatmul.mubr.f32.gmra.mxu0 %v194
    %v418 = vpop.f32.mrf.mxu0
    %v419 = vadd.f32 %v125, %v418
    %v420 = vpop.f32.mrf.mxu0
    %v421 = vadd.f32 %v125, %v420
    %422 = vmatprep.mubr.f32.mxu0 0.0
    %423 = vmatmul.mubr.f32.gmra.mxu0 %v197
    %v424 = vpop.f32.mrf.mxu0
    %v425 = vadd.f32 %v130, %v424
    %v426 = vpop.f32.mrf.mxu0
    %v427 = vadd.f32 %v130, %v426
    %428 = vmatprep.mubr.f32.mxu0 0.0
    %429 = vmatmul.mubr.f32.gmra.mxu0 %v200
    %v430 = vpop.f32.mrf.mxu0
    %v431 = vadd.f32 %v135, %v430
    %v432 = vpop.f32.mrf.mxu0
    %v433 = vadd.f32 %v135, %v432
    %434 = vmatprep.mubr.f32.mxu0 0.0
    %435 = vmatmul.mubr.f32.gmra.mxu0 %v203
    %v436 = vpop.f32.mrf.mxu0
    %v437 = vadd.f32 %v140, %v436
    %v438 = vpop.f32.mrf.mxu0
    %v439 = vadd.f32 %v140, %v438
    %440 = vmatprep.mubr.f32.mxu0 0.0
    %441 = vmatmul.mubr.f32.gmra.mxu0 %v206
    %v442 = vpop.f32.mrf.mxu0
    %v443 = vadd.f32 %v145, %v442
    %v444 = vpop.f32.mrf.mxu0
    %v445 = vadd.f32 %v145, %v444
    %446 = vmatprep.mubr.f32.mxu0 0.0
    %447 = vmatmul.mubr.f32.gmra.mxu0 %v209
    %v448 = vpop.f32.mrf.mxu0
    %v449 = vadd.f32 %v150, %v448
    %v450 = vpop.f32.mrf.mxu0
    %v451 = vadd.f32 %v150, %v450
    %452 = vmatprep.mubr.f32.mxu0 0.0
    %453 = vmatmul.mubr.f32.gmra.mxu0 %v212
    %v454 = vpop.f32.mrf.mxu0
    %v455 = vadd.f32 %v155, %v454
    %v456 = vpop.f32.mrf.mxu0
    %v457 = vadd.f32 %v155, %v456
    %458 = vmatprep.mubr.f32.mxu0 0.0
    %459 = vmatmul.mubr.f32.gmra.mxu0 %v215
    %v460 = vpop.f32.mrf.mxu0
    %v461 = vadd.f32 %v160, %v460
    %v462 = vpop.f32.mrf.mxu0
    %v463 = vadd.f32 %v160, %v462
    %464 = vmatprep.mubr.f32.mxu0 0.0
    %465 = vmatmul.mubr.f32.gmra.mxu0 %v218
    %v466 = vpop.f32.mrf.mxu0
    %v467 = vadd.f32 %v165, %v466
    %v468 = vpop.f32.mrf.mxu0
    %v469 = vadd.f32 %v165, %v468
    %470 = vmatprep.mubr.f32.mxu0 0.0
    %471 = vmatmul.mubr.f32.gmra.mxu0 %v221
    %v472 = vpop.f32.mrf.mxu0
    %v473 = vadd.f32 %v170, %v472
    %v474 = vpop.f32.mrf.mxu0
    %v475 = vadd.f32 %v170, %v474
    %476 = vmatprep.mubr.f32.mxu0 0.0
    %477 = vmatmul.mubr.f32.gmra.mxu0 %v224
    %v478 = vpop.f32.mrf.mxu0
    %v479 = vadd.f32 %v175, %v478
    %v480 = vpop.f32.mrf.mxu0
    %v481 = vadd.f32 %v175, %v480
    %482 = vdwg.mxu0
    %v483 = vmax.f32 %v389, 0.0
    %v484 = vmax.f32 %v391, 0.0
    %v485 = vmax.f32 %v395, 0.0
    %v486 = vmax.f32 %v397, 0.0
    %v487 = vmax.f32 %v401, 0.0
    %v488 = vmax.f32 %v403, 0.0
    %v489 = vmax.f32 %v407, 0.0
    %v490 = vmax.f32 %v409, 0.0
    %v491 = vmax.f32 %v413, 0.0
    %v492 = vmax.f32 %v415, 0.0
    %v493 = vmax.f32 %v419, 0.0
    %v494 = vmax.f32 %v421, 0.0
    %v495 = vmax.f32 %v425, 0.0
    %v496 = vmax.f32 %v427, 0.0
    %v497 = vmax.f32 %v431, 0.0
    %v498 = vmax.f32 %v433, 0.0
    %v499 = vmax.f32 %v437, 0.0
    %v500 = vmax.f32 %v439, 0.0
    %v501 = vmax.f32 %v443, 0.0
    %v502 = vmax.f32 %v445, 0.0
    %v503 = vmax.f32 %v449, 0.0
    %v504 = vmax.f32 %v451, 0.0
    %v505 = vmax.f32 %v455, 0.0
    %v506 = vmax.f32 %v457, 0.0
    %v507 = vmax.f32 %v461, 0.0
    %v508 = vmax.f32 %v463, 0.0
    %v509 = vmax.f32 %v467, 0.0
    %v510 = vmax.f32 %v469, 0.0
    %v511 = vmax.f32 %v473, 0.0
    %v512 = vmax.f32 %v475, 0.0
    %v513 = vmax.f32 %v479, 0.0
    %v514 = vmax.f32 %v481, 0.0
    %v515 = vld [vmem:[%s3] sm:$0xff]
    %v516 = vld [vmem:[%s3 + $0x8] sm:$0xff]
    %v517 = vld [vmem:[%s3 + $0x10] sm:$0xff]
    %v518 = vld [vmem:[%s3 + $0x18] sm:$0xff]
    %v519 = vld [vmem:[%s3 + $0x20] sm:$0xff]
    %v520 = vld [vmem:[%s3 + $0x28] sm:$0xff]
    %v521 = vld [vmem:[%s3 + $0x30] sm:$0xff]
    %v522 = vld [vmem:[%s3 + $0x38] sm:$0xff]
    %v523 = vld [vmem:[%s3 + $0x40] sm:$0xff]
    %v524 = vld [vmem:[%s3 + $0x48] sm:$0xff]
    %v525 = vld [vmem:[%s3 + $0x50] sm:$0xff]
    %v526 = vld [vmem:[%s3 + $0x58] sm:$0xff]
    %v527 = vld [vmem:[%s3 + $0x60] sm:$0xff]
    %v528 = vld [vmem:[%s3 + $0x68] sm:$0xff]
    %v529 = vld [vmem:[%s3 + $0x70] sm:$0xff]
    %v530 = vld [vmem:[%s3 + $0x78] sm:$0xff]
    %v531 = vld [vmem:[%s4] sm:$0xff]
    %v532 = vld [vmem:[%s4 + $0x8] sm:$0xff]
    %v533 = vld [vmem:[%s4 + $0x10] sm:$0xff]
    %v534 = vld [vmem:[%s4 + $0x18] sm:$0xff]
    %v535 = vld [vmem:[%s4 + $0x20] sm:$0xff]
    %v536 = vld [vmem:[%s4 + $0x28] sm:$0xff]
    %v537 = vld [vmem:[%s4 + $0x30] sm:$0xff]
    %v538 = vld [vmem:[%s4 + $0x38] sm:$0xff]
    %v539 = vld [vmem:[%s4 + $0x40] sm:$0xff]
    %v540 = vld [vmem:[%s4 + $0x48] sm:$0xff]
    %v541 = vld [vmem:[%s4 + $0x50] sm:$0xff]
    %v542 = vld [vmem:[%s4 + $0x58] sm:$0xff]
    %v543 = vld [vmem:[%s4 + $0x60] sm:$0xff]
    %v544 = vld [vmem:[%s4 + $0x68] sm:$0xff]
    %v545 = vld [vmem:[%s4 + $0x70] sm:$0xff]
    %v546 = vld [vmem:[%s4 + $0x78] sm:$0xff]
    %v547 = vld [vmem:[%s5] sm:$0xff]
    %v548 = vld [vmem:[%s5 + $0x8] sm:$0xff]
    %v549 = vld [vmem:[%s5 + $0x10] sm:$0xff]
    %v550 = vld [vmem:[%s5 + $0x18] sm:$0xff]
    %v551 = vld [vmem:[%s5 + $0x20] sm:$0xff]
    %v552 = vld [vmem:[%s5 + $0x28] sm:$0xff]
    %v553 = vld [vmem:[%s5 + $0x30] sm:$0xff]
    %v554 = vld [vmem:[%s5 + $0x38] sm:$0xff]
    %v555 = vld [vmem:[%s5 + $0x40] sm:$0xff]
    %v556 = vld [vmem:[%s5 + $0x48] sm:$0xff]
    %v557 = vld [vmem:[%s5 + $0x50] sm:$0xff]
    %v558 = vld [vmem:[%s5 + $0x58] sm:$0xff]
    %v559 = vld [vmem:[%s5 + $0x60] sm:$0xff]
    %v560 = vld [vmem:[%s5 + $0x68] sm:$0xff]
    %v561 = vld [vmem:[%s5 + $0x70] sm:$0xff]
    %v562 = vld [vmem:[%s5 + $0x78] sm:$0xff]
    %563 = vmatprep.subr.mxu0 %v514
    %564 = vmatpush1.msra.mxu0 %v513
    %565 = vmatprep.subr.mxu0 %v512
    %566 = vmatpush1.msra.mxu0 %v511
    %567 = vmatprep.subr.mxu0 %v510
    %568 = vmatpush1.msra.mxu0 %v509
    %569 = vmatprep.subr.mxu0 %v508
    %570 = vmatpush1.msra.mxu0 %v507
    %571 = vmatprep.subr.mxu0 %v506
    %572 = vmatpush1.msra.mxu0 %v505
    %573 = vmatprep.subr.mxu0 %v504
    %574 = vmatpush1.msra.mxu0 %v503
    %575 = vmatprep.subr.mxu0 %v502
    %576 = vmatpush1.msra.mxu0 %v501
    %577 = vmatprep.subr.mxu0 %v500
    %578 = vmatpush1.msra.mxu0 %v499
    %579 = vmatprep.subr.mxu0 %v498
    %580 = vmatpush1.msra.mxu0 %v497
    %581 = vmatprep.subr.mxu0 %v496
    %582 = vmatpush1.msra.mxu0 %v495
    %583 = vmatprep.subr.mxu0 %v494
    %584 = vmatpush1.msra.mxu0 %v493
    %585 = vmatprep.subr.mxu0 %v492
    %586 = vmatpush1.msra.mxu0 %v491
    %587 = vmatprep.subr.mxu0 %v490
    %588 = vmatpush1.msra.mxu0 %v489
    %589 = vmatprep.subr.mxu0 %v488
    %590 = vmatpush1.msra.mxu0 %v487
    %591 = vmatprep.subr.mxu0 %v486
    %592 = vmatpush1.msra.mxu0 %v485
    %593 = vmatprep.subr.mxu0 %v484
    %594 = vmatpush1.msra.mxu0 %v483
    %595 = vmatprep.subr.mxu0 0.0
    %596 = vmatpush2.msra.mxu0 0.0
    %597 = vmatprep.subr.mxu0 0.0
    %598 = vmatpush2.msra.mxu0 0.0
    %599 = vmatprep.subr.mxu0 0.0
    %600 = vmatpush2.msra.mxu0 0.0
    %601 = vmatprep.subr.mxu0 0.0
    %602 = vmatpush2.msra.mxu0 0.0
    %603 = vmatprep.subr.mxu0 0.0
    %604 = vmatpush2.msra.mxu0 0.0
    %605 = vmatprep.subr.mxu0 0.0
    %606 = vmatpush2.msra.mxu0 0.0
    %607 = vmatprep.subr.mxu0 0.0
    %608 = vmatpush2.msra.mxu0 0.0
    %609 = vmatprep.subr.mxu0 0.0
    %610 = vmatpush2.msra.mxu0 0.0
    %611 = vmatprep.subr.mxu0 0.0
    %612 = vmatpush2.msra.mxu0 0.0
    %613 = vmatprep.subr.mxu0 0.0
    %614 = vmatpush2.msra.mxu0 0.0
    %615 = vmatprep.subr.mxu0 0.0
    %616 = vmatpush2.msra.mxu0 0.0
    %617 = vmatprep.subr.mxu0 0.0
    %618 = vmatpush2.msra.mxu0 0.0
    %619 = vmatprep.subr.mxu0 0.0
    %620 = vmatpush2.msra.mxu0 0.0
    %621 = vmatprep.subr.mxu0 0.0
    %622 = vmatpush2.msra.mxu0 0.0
    %623 = vmatprep.subr.mxu0 0.0
    %624 = vmatpush2.msra.mxu0 0.0
    %625 = vmatprep.subr.mxu0 0.0
    %626 = vmatpush2.msra.mxu0 0.0
    %627 = vmatprep.mubr.f32.mxu0 0.0
    %628 = vmatmul.mubr.f32.gmra.mxu0 %v547
    %v629 = vpop.f32.mrf.mxu0
    %v630 = vadd.f32 0.0, %v629
    %v631 = vpop.f32.mrf.mxu0
    %v632 = vadd.f32 0.0, %v631
    %633 = vmatprep.mubr.f32.mxu0 0.0
    %634 = vmatmul.mubr.f32.gmra.mxu0 %v548
    %v635 = vpop.f32.mrf.mxu0
    %v636 = vadd.f32 0.0, %v635
    %v637 = vpop.f32.mrf.mxu0
    %v638 = vadd.f32 0.0, %v637
    %639 = vmatprep.mubr.f32.mxu0 0.0
    %640 = vmatmul.mubr.f32.gmra.mxu0 %v549
    %v641 = vpop.f32.mrf.mxu0
    %v642 = vadd.f32 0.0, %v641
    %v643 = vpop.f32.mrf.mxu0
    %v644 = vadd.f32 0.0, %v643
    %645 = vmatprep.mubr.f32.mxu0 0.0
    %646 = vmatmul.mubr.f32.gmra.mxu0 %v550
    %v647 = vpop.f32.mrf.mxu0
    %v648 = vadd.f32 0.0, %v647
    %v649 = vpop.f32.mrf.mxu0
    %v650 = vadd.f32 0.0, %v649
    %651 = vmatprep.mubr.f32.mxu0 0.0
    %652 = vmatmul.mubr.f32.gmra.mxu0 %v551
    %v653 = vpop.f32.mrf.mxu0
    %v654 = vadd.f32 0.0, %v653
    %v655 = vpop.f32.mrf.mxu0
    %v656 = vadd.f32 0.0, %v655
    %657 = vmatprep.mubr.f32.mxu0 0.0
    %658 = vmatmul.mubr.f32.gmra.mxu0 %v552
    %v659 = vpop.f32.mrf.mxu0
    %v660 = vadd.f32 0.0, %v659
    %v661 = vpop.f32.mrf.mxu0
    %v662 = vadd.f32 0.0, %v661
    %663 = vmatprep.mubr.f32.mxu0 0.0
    %664 = vmatmul.mubr.f32.gmra.mxu0 %v553
    %v665 = vpop.f32.mrf.mxu0
    %v666 = vadd.f32 0.0, %v665
    %v667 = vpop.f32.mrf.mxu0
    %v668 = vadd.f32 0.0, %v667
    %669 = vmatprep.mubr.f32.mxu0 0.0
    %670 = vmatmul.mubr.f32.gmra.mxu0 %v554
    %v671 = vpop.f32.mrf.mxu0
    %v672 = vadd.f32 0.0, %v671
    %v673 = vpop.f32.mrf.mxu0
    %v674 = vadd.f32 0.0, %v673
    %675 = vmatprep.mubr.f32.mxu0 0.0
    %676 = vmatmul.mubr.f32.gmra.mxu0 %v555
    %v677 = vpop.f32.mrf.mxu0
    %v678 = vadd.f32 0.0, %v677
    %v679 = vpop.f32.mrf.mxu0
    %v680 = vadd.f32 0.0, %v679
    %681 = vmatprep.mubr.f32.mxu0 0.0
    %682 = vmatmul.mubr.f32.gmra.mxu0 %v556
    %v683 = vpop.f32.mrf.mxu0
    %v684 = vadd.f32 0.0, %v683
    %v685 = vpop.f32.mrf.mxu0
    %v686 = vadd.f32 0.0, %v685
    %687 = vmatprep.mubr.f32.mxu0 0.0
    %688 = vmatmul.mubr.f32.gmra.mxu0 %v557
    %v689 = vpop.f32.mrf.mxu0
    %v690 = vadd.f32 0.0, %v689
    %v691 = vpop.f32.mrf.mxu0
    %v692 = vadd.f32 0.0, %v691
    %693 = vmatprep.mubr.f32.mxu0 0.0
    %694 = vmatmul.mubr.f32.gmra.mxu0 %v558
    %v695 = vpop.f32.mrf.mxu0
    %v696 = vadd.f32 0.0, %v695
    %v697 = vpop.f32.mrf.mxu0
    %v698 = vadd.f32 0.0, %v697
    %699 = vmatprep.mubr.f32.mxu0 0.0
    %700 = vmatmul.mubr.f32.gmra.mxu0 %v559
    %v701 = vpop.f32.mrf.mxu0
    %v702 = vadd.f32 0.0, %v701
    %v703 = vpop.f32.mrf.mxu0
    %v704 = vadd.f32 0.0, %v703
    %705 = vmatprep.mubr.f32.mxu0 0.0
    %706 = vmatmul.mubr.f32.gmra.mxu0 %v560
    %v707 = vpop.f32.mrf.mxu0
    %v708 = vadd.f32 0.0, %v707
    %v709 = vpop.f32.mrf.mxu0
    %v710 = vadd.f32 0.0, %v709
    %711 = vmatprep.mubr.f32.mxu0 0.0
    %712 = vmatmul.mubr.f32.gmra.mxu0 %v561
    %v713 = vpop.f32.mrf.mxu0
    %v714 = vadd.f32 0.0, %v713
    %v715 = vpop.f32.mrf.mxu0
    %v716 = vadd.f32 0.0, %v715
    %717 = vmatprep.mubr.f32.mxu0 0.0
    %718 = vmatmul.mubr.f32.gmra.mxu0 %v562
    %v719 = vpop.f32.mrf.mxu0
    %v720 = vadd.f32 0.0, %v719
    %v721 = vpop.f32.mrf.mxu0
    %v722 = vadd.f32 0.0, %v721
    %723 = vdwg.mxu0
    %725 = vset.pattern.permute.xlu0 0
    %726 = vperm.xlu0 %725, %v531
    %v727 = vpop.permute.xlu0 %726
    %730 = vset.pattern.permute.xlu0 0
    %731 = vperm.xlu0 %730, %v532
    %v732 = vpop.permute.xlu0 %731
    %735 = vset.pattern.permute.xlu0 0
    %736 = vperm.xlu0 %735, %v533
    %v737 = vpop.permute.xlu0 %736
    %740 = vset.pattern.permute.xlu0 0
    %741 = vperm.xlu0 %740, %v534
    %v742 = vpop.permute.xlu0 %741
    %745 = vset.pattern.permute.xlu0 0
    %746 = vperm.xlu0 %745, %v535
    %v747 = vpop.permute.xlu0 %746
    %750 = vset.pattern.permute.xlu0 0
    %751 = vperm.xlu0 %750, %v536
    %v752 = vpop.permute.xlu0 %751
    %755 = vset.pattern.permute.xlu0 0
    %756 = vperm.xlu0 %755, %v537
    %v757 = vpop.permute.xlu0 %756
    %760 = vset.pattern.permute.xlu0 0
    %761 = vperm.xlu0 %760, %v538
    %v762 = vpop.permute.xlu0 %761
    %765 = vset.pattern.permute.xlu0 0
    %766 = vperm.xlu0 %765, %v539
    %v767 = vpop.permute.xlu0 %766
    %770 = vset.pattern.permute.xlu0 0
    %771 = vperm.xlu0 %770, %v540
    %v772 = vpop.permute.xlu0 %771
    %775 = vset.pattern.permute.xlu0 0
    %776 = vperm.xlu0 %775, %v541
    %v777 = vpop.permute.xlu0 %776
    %780 = vset.pattern.permute.xlu0 0
    %781 = vperm.xlu0 %780, %v542
    %v782 = vpop.permute.xlu0 %781
    %785 = vset.pattern.permute.xlu0 0
    %786 = vperm.xlu0 %785, %v543
    %v787 = vpop.permute.xlu0 %786
    %790 = vset.pattern.permute.xlu0 0
    %791 = vperm.xlu0 %790, %v544
    %v792 = vpop.permute.xlu0 %791
    %795 = vset.pattern.permute.xlu0 0
    %796 = vperm.xlu0 %795, %v545
    %v797 = vpop.permute.xlu0 %796
    %800 = vset.pattern.permute.xlu0 0
    %801 = vperm.xlu0 %800, %v546
    %v802 = vpop.permute.xlu0 %801
    %v805 = vsel %vm177, %v515, 0
    %v808 = vsel %vm177, %v516, 0
    %v811 = vsel %vm177, %v517, 0
    %v814 = vsel %vm177, %v518, 0
    %v817 = vsel %vm177, %v519, 0
    %v820 = vsel %vm177, %v520, 0
    %v823 = vsel %vm177, %v521, 0
    %v826 = vsel %vm177, %v522, 0
    %v829 = vsel %vm177, %v523, 0
    %v832 = vsel %vm177, %v524, 0
    %v835 = vsel %vm177, %v525, 0
    %v838 = vsel %vm177, %v526, 0
    %v841 = vsel %vm177, %v527, 0
    %v844 = vsel %vm177, %v528, 0
    %v847 = vsel %vm177, %v529, 0
    %v850 = vsel %vm177, %v530, 0
    %852 = vmatprep.subr.mxu0 0.0
    %853 = vmatpush1.xpose.msra.mxu0 %v272
    %854 = vmatprep.subr.mxu0 0.0
    %855 = vmatpush1.xpose.msra.mxu0 %v269
    %856 = vmatprep.subr.mxu0 0.0
    %857 = vmatpush1.xpose.msra.mxu0 %v266
    %858 = vmatprep.subr.mxu0 0.0
    %859 = vmatpush1.xpose.msra.mxu0 %v263
    %860 = vmatprep.subr.mxu0 0.0
    %861 = vmatpush1.xpose.msra.mxu0 %v260
    %862 = vmatprep.subr.mxu0 0.0
    %863 = vmatpush1.xpose.msra.mxu0 %v257
    %864 = vmatprep.subr.mxu0 0.0
    %865 = vmatpush1.xpose.msra.mxu0 %v254
    %866 = vmatprep.subr.mxu0 0.0
    %867 = vmatpush1.xpose.msra.mxu0 %v251
    %868 = vmatprep.subr.mxu0 0.0
    %869 = vmatpush1.xpose.msra.mxu0 %v248
    %870 = vmatprep.subr.mxu0 0.0
    %871 = vmatpush1.xpose.msra.mxu0 %v245
    %872 = vmatprep.subr.mxu0 0.0
    %873 = vmatpush1.xpose.msra.mxu0 %v242
    %874 = vmatprep.subr.mxu0 0.0
    %875 = vmatpush1.xpose.msra.mxu0 %v239
    %876 = vmatprep.subr.mxu0 0.0
    %877 = vmatpush1.xpose.msra.mxu0 %v236
    %878 = vmatprep.subr.mxu0 0.0
    %879 = vmatpush1.xpose.msra.mxu0 %v233
    %880 = vmatprep.subr.mxu0 0.0
    %881 = vmatpush1.xpose.msra.mxu0 %v230
    %882 = vmatprep.subr.mxu0 0.0
    %883 = vmatpush1.xpose.msra.mxu0 %v227
    %884 = vmatprep.subr.mxu0 0.0
    %885 = vmatpush2.xpose.msra.mxu0 %v320
    %886 = vmatprep.subr.mxu0 0.0
    %887 = vmatpush2.xpose.msra.mxu0 %v317
    %888 = vmatprep.subr.mxu0 0.0
    %889 = vmatpush2.xpose.msra.mxu0 %v314
    %890 = vmatprep.subr.mxu0 0.0
    %891 = vmatpush2.xpose.msra.mxu0 %v311
    %892 = vmatprep.subr.mxu0 0.0
    %893 = vmatpush2.xpose.msra.mxu0 %v308
    %894 = vmatprep.subr.mxu0 0.0
    %895 = vmatpush2.xpose.msra.mxu0 %v305
    %896 = vmatprep.subr.mxu0 0.0
    %897 = vmatpush2.xpose.msra.mxu0 %v302
    %898 = vmatprep.subr.mxu0 0.0
    %899 = vmatpush2.xpose.msra.mxu0 %v299
    %900 = vmatprep.subr.mxu0 0.0
    %901 = vmatpush2.xpose.msra.mxu0 %v296
    %902 = vmatprep.subr.mxu0 0.0
    %903 = vmatpush2.xpose.msra.mxu0 %v293
    %904 = vmatprep.subr.mxu0 0.0
    %905 = vmatpush2.xpose.msra.mxu0 %v290
    %906 = vmatprep.subr.mxu0 0.0
    %907 = vmatpush2.xpose.msra.mxu0 %v287
    %908 = vmatprep.subr.mxu0 0.0
    %909 = vmatpush2.xpose.msra.mxu0 %v284
    %910 = vmatprep.subr.mxu0 0.0
    %911 = vmatpush2.xpose.msra.mxu0 %v281
    %912 = vmatprep.subr.mxu0 0.0
    %913 = vmatpush2.xpose.msra.mxu0 %v278
    %914 = vmatprep.subr.mxu0 0.0
    %915 = vmatpush2.xpose.msra.mxu0 %v275
    %916 = vmatprep.mubr.f32.mxu0 0.0
    %917 = vmatmul.mubr.f32.gmra.mxu0 %v805
    %v918 = vpop.f32.mrf.mxu0
    %v919 = vadd.f32 %v727, %v918
    %v920 = vpop.f32.mrf.mxu0
    %v921 = vadd.f32 %v727, %v920
    %922 = vmatprep.mubr.f32.mxu0 0.0
    %923 = vmatmul.mubr.f32.gmra.mxu0 %v808
    %v924 = vpop.f32.mrf.mxu0
    %v925 = vadd.f32 %v732, %v924
    %v926 = vpop.f32.mrf.mxu0
    %v927 = vadd.f32 %v732, %v926
    %928 = vmatprep.mubr.f32.mxu0 0.0
    %929 = vmatmul.mubr.f32.gmra.mxu0 %v811
    %v930 = vpop.f32.mrf.mxu0
    %v931 = vadd.f32 %v737, %v930
    %v932 = vpop.f32.mrf.mxu0
    %v933 = vadd.f32 %v737, %v932
    %934 = vmatprep.mubr.f32.mxu0 0.0
    %935 = vmatmul.mubr.f32.gmra.mxu0 %v814
    %v936 = vpop.f32.mrf.mxu0
    %v937 = vadd.f32 %v742, %v936
    %v938 = vpop.f32.mrf.mxu0
    %v939 = vadd.f32 %v742, %v938
    %940 = vmatprep.mubr.f32.mxu0 0.0
    %941 = vmatmul.mubr.f32.gmra.mxu0 %v817
    %v942 = vpop.f32.mrf.mxu0
    %v943 = vadd.f32 %v747, %v942
    %v944 = vpop.f32.mrf.mxu0
    %v945 = vadd.f32 %v747, %v944
    %946 = vmatprep.mubr.f32.mxu0 0.0
    %947 = vmatmul.mubr.f32.gmra.mxu0 %v820
    %v948 = vpop.f32.mrf.mxu0
    %v949 = vadd.f32 %v752, %v948
    %v950 = vpop.f32.mrf.mxu0
    %v951 = vadd.f32 %v752, %v950
    %952 = vmatprep.mubr.f32.mxu0 0.0
    %953 = vmatmul.mubr.f32.gmra.mxu0 %v823
    %v954 = vpop.f32.mrf.mxu0
    %v955 = vadd.f32 %v757, %v954
    %v956 = vpop.f32.mrf.mxu0
    %v957 = vadd.f32 %v757, %v956
    %958 = vmatprep.mubr.f32.mxu0 0.0
    %959 = vmatmul.mubr.f32.gmra.mxu0 %v826
    %v960 = vpop.f32.mrf.mxu0
    %v961 = vadd.f32 %v762, %v960
    %v962 = vpop.f32.mrf.mxu0
    %v963 = vadd.f32 %v762, %v962
    %964 = vmatprep.mubr.f32.mxu0 0.0
    %965 = vmatmul.mubr.f32.gmra.mxu0 %v829
    %v966 = vpop.f32.mrf.mxu0
    %v967 = vadd.f32 %v767, %v966
    %v968 = vpop.f32.mrf.mxu0
    %v969 = vadd.f32 %v767, %v968
    %970 = vmatprep.mubr.f32.mxu0 0.0
    %971 = vmatmul.mubr.f32.gmra.mxu0 %v832
    %v972 = vpop.f32.mrf.mxu0
    %v973 = vadd.f32 %v772, %v972
    %v974 = vpop.f32.mrf.mxu0
    %v975 = vadd.f32 %v772, %v974
    %976 = vmatprep.mubr.f32.mxu0 0.0
    %977 = vmatmul.mubr.f32.gmra.mxu0 %v835
    %v978 = vpop.f32.mrf.mxu0
    %v979 = vadd.f32 %v777, %v978
    %v980 = vpop.f32.mrf.mxu0
    %v981 = vadd.f32 %v777, %v980
    %982 = vmatprep.mubr.f32.mxu0 0.0
    %983 = vmatmul.mubr.f32.gmra.mxu0 %v838
    %v984 = vpop.f32.mrf.mxu0
    %v985 = vadd.f32 %v782, %v984
    %v986 = vpop.f32.mrf.mxu0
    %v987 = vadd.f32 %v782, %v986
    %988 = vmatprep.mubr.f32.mxu0 0.0
    %989 = vmatmul.mubr.f32.gmra.mxu0 %v841
    %v990 = vpop.f32.mrf.mxu0
    %v991 = vadd.f32 %v787, %v990
    %v992 = vpop.f32.mrf.mxu0
    %v993 = vadd.f32 %v787, %v992
    %994 = vmatprep.mubr.f32.mxu0 0.0
    %995 = vmatmul.mubr.f32.gmra.mxu0 %v844
    %v996 = vpop.f32.mrf.mxu0
    %v997 = vadd.f32 %v792, %v996
    %v998 = vpop.f32.mrf.mxu0
    %v999 = vadd.f32 %v792, %v998
    %1000 = vmatprep.mubr.f32.mxu0 0.0
    %1001 = vmatmul.mubr.f32.gmra.mxu0 %v847
    %v1002 = vpop.f32.mrf.mxu0
    %v1003 = vadd.f32 %v797, %v1002
    %v1004 = vpop.f32.mrf.mxu0
    %v1005 = vadd.f32 %v797, %v1004
    %1006 = vmatprep.mubr.f32.mxu0 0.0
    %1007 = vmatmul.mubr.f32.gmra.mxu0 %v850
    %v1008 = vpop.f32.mrf.mxu0
    %v1009 = vadd.f32 %v802, %v1008
    %v1010 = vpop.f32.mrf.mxu0
    %v1011 = vadd.f32 %v802, %v1010
    %1012 = vdwg.mxu0
    %v1013 = vadd.f32 %v919, %v630
    %v1014 = vadd.f32 %v921, %v632
    %v1015 = vadd.f32 %v925, %v636
    %v1016 = vadd.f32 %v927, %v638
    %v1017 = vadd.f32 %v931, %v642
    %v1018 = vadd.f32 %v933, %v644
    %v1019 = vadd.f32 %v937, %v648
    %v1020 = vadd.f32 %v939, %v650
    %v1021 = vadd.f32 %v943, %v654
    %v1022 = vadd.f32 %v945, %v656
    %v1023 = vadd.f32 %v949, %v660
    %v1024 = vadd.f32 %v951, %v662
    %v1025 = vadd.f32 %v955, %v666
    %v1026 = vadd.f32 %v957, %v668
    %v1027 = vadd.f32 %v961, %v672
    %v1028 = vadd.f32 %v963, %v674
    %v1029 = vadd.f32 %v967, %v678
    %v1030 = vadd.f32 %v969, %v680
    %v1031 = vadd.f32 %v973, %v684
    %v1032 = vadd.f32 %v975, %v686
    %v1033 = vadd.f32 %v979, %v690
    %v1034 = vadd.f32 %v981, %v692
    %v1035 = vadd.f32 %v985, %v696
    %v1036 = vadd.f32 %v987, %v698
    %v1037 = vadd.f32 %v991, %v702
    %v1038 = vadd.f32 %v993, %v704
    %v1039 = vadd.f32 %v997, %v708
    %v1040 = vadd.f32 %v999, %v710
    %v1041 = vadd.f32 %v1003, %v714
    %v1042 = vadd.f32 %v1005, %v716
    %v1043 = vadd.f32 %v1009, %v720
    %v1044 = vadd.f32 %v1011, %v722
    %v1045 = vmax.f32 %v1013, 0.0
    %v1046 = vmax.f32 %v1014, 0.0
    %v1047 = vmax.f32 %v1015, 0.0
    %v1048 = vmax.f32 %v1016, 0.0
    %v1049 = vmax.f32 %v1017, 0.0
    %v1050 = vmax.f32 %v1018, 0.0
    %v1051 = vmax.f32 %v1019, 0.0
    %v1052 = vmax.f32 %v1020, 0.0
    %v1053 = vmax.f32 %v1021, 0.0
    %v1054 = vmax.f32 %v1022, 0.0
    %v1055 = vmax.f32 %v1023, 0.0
    %v1056 = vmax.f32 %v1024, 0.0
    %v1057 = vmax.f32 %v1025, 0.0
    %v1058 = vmax.f32 %v1026, 0.0
    %v1059 = vmax.f32 %v1027, 0.0
    %v1060 = vmax.f32 %v1028, 0.0
    %v1061 = vmax.f32 %v1029, 0.0
    %v1062 = vmax.f32 %v1030, 0.0
    %v1063 = vmax.f32 %v1031, 0.0
    %v1064 = vmax.f32 %v1032, 0.0
    %v1065 = vmax.f32 %v1033, 0.0
    %v1066 = vmax.f32 %v1034, 0.0
    %v1067 = vmax.f32 %v1035, 0.0
    %v1068 = vmax.f32 %v1036, 0.0
    %v1069 = vmax.f32 %v1037, 0.0
    %v1070 = vmax.f32 %v1038, 0.0
    %v1071 = vmax.f32 %v1039, 0.0
    %v1072 = vmax.f32 %v1040, 0.0
    %v1073 = vmax.f32 %v1041, 0.0
    %v1074 = vmax.f32 %v1042, 0.0
    %v1075 = vmax.f32 %v1043, 0.0
    %v1076 = vmax.f32 %v1044, 0.0
    %v1077 = vld [vmem:[%s6] sm:$0xff]
    %v1078 = vld [vmem:[%s6 + $0x8] sm:$0xff]
    %v1079 = vld [vmem:[%s6 + $0x10] sm:$0xff]
    %v1080 = vld [vmem:[%s6 + $0x18] sm:$0xff]
    %v1081 = vld [vmem:[%s6 + $0x20] sm:$0xff]
    %v1082 = vld [vmem:[%s6 + $0x28] sm:$0xff]
    %v1083 = vld [vmem:[%s6 + $0x30] sm:$0xff]
    %v1084 = vld [vmem:[%s6 + $0x38] sm:$0xff]
    %v1085 = vld [vmem:[%s7] sm:$0xff]
    %v1086 = vld [vmem:[%s7 + $0x8] sm:$0xff]
    %v1087 = vld [vmem:[%s7 + $0x10] sm:$0xff]
    %v1088 = vld [vmem:[%s7 + $0x18] sm:$0xff]
    %v1089 = vld [vmem:[%s7 + $0x20] sm:$0xff]
    %v1090 = vld [vmem:[%s7 + $0x28] sm:$0xff]
    %v1091 = vld [vmem:[%s7 + $0x30] sm:$0xff]
    %v1092 = vld [vmem:[%s7 + $0x38] sm:$0xff]
    %v1093 = vld [vmem:[%s8] sm:$0xff]
    %v1094 = vld [vmem:[%s8 + $0x8] sm:$0xff]
    %v1095 = vld [vmem:[%s8 + $0x10] sm:$0xff]
    %v1096 = vld [vmem:[%s8 + $0x18] sm:$0xff]
    %v1097 = vld [vmem:[%s8 + $0x20] sm:$0xff]
    %v1098 = vld [vmem:[%s8 + $0x28] sm:$0xff]
    %v1099 = vld [vmem:[%s8 + $0x30] sm:$0xff]
    %v1100 = vld [vmem:[%s8 + $0x38] sm:$0xff]
    %1101 = vmatprep.subr.mxu0 %v1076
    %1102 = vmatpush1.msra.mxu0 %v1075
    %1103 = vmatprep.subr.mxu0 %v1074
    %1104 = vmatpush1.msra.mxu0 %v1073
    %1105 = vmatprep.subr.mxu0 %v1072
    %1106 = vmatpush1.msra.mxu0 %v1071
    %1107 = vmatprep.subr.mxu0 %v1070
    %1108 = vmatpush1.msra.mxu0 %v1069
    %1109 = vmatprep.subr.mxu0 %v1068
    %1110 = vmatpush1.msra.mxu0 %v1067
    %1111 = vmatprep.subr.mxu0 %v1066
    %1112 = vmatpush1.msra.mxu0 %v1065
    %1113 = vmatprep.subr.mxu0 %v1064
    %1114 = vmatpush1.msra.mxu0 %v1063
    %1115 = vmatprep.subr.mxu0 %v1062
    %1116 = vmatpush1.msra.mxu0 %v1061
    %1117 = vmatprep.subr.mxu0 %v1060
    %1118 = vmatpush1.msra.mxu0 %v1059
    %1119 = vmatprep.subr.mxu0 %v1058
    %1120 = vmatpush1.msra.mxu0 %v1057
    %1121 = vmatprep.subr.mxu0 %v1056
    %1122 = vmatpush1.msra.mxu0 %v1055
    %1123 = vmatprep.subr.mxu0 %v1054
    %1124 = vmatpush1.msra.mxu0 %v1053
    %1125 = vmatprep.subr.mxu0 %v1052
    %1126 = vmatpush1.msra.mxu0 %v1051
    %1127 = vmatprep.subr.mxu0 %v1050
    %1128 = vmatpush1.msra.mxu0 %v1049
    %1129 = vmatprep.subr.mxu0 %v1048
    %1130 = vmatpush1.msra.mxu0 %v1047
    %1131 = vmatprep.subr.mxu0 %v1046
    %1132 = vmatpush1.msra.mxu0 %v1045
    %1133 = vmatprep.subr.mxu0 0.0
    %1134 = vmatpush2.msra.mxu0 0.0
    %1135 = vmatprep.subr.mxu0 0.0
    %1136 = vmatpush2.msra.mxu0 0.0
    %1137 = vmatprep.subr.mxu0 0.0
    %1138 = vmatpush2.msra.mxu0 0.0
    %1139 = vmatprep.subr.mxu0 0.0
    %1140 = vmatpush2.msra.mxu0 0.0
    %1141 = vmatprep.subr.mxu0 0.0
    %1142 = vmatpush2.msra.mxu0 0.0
    %1143 = vmatprep.subr.mxu0 0.0
    %1144 = vmatpush2.msra.mxu0 0.0
    %1145 = vmatprep.subr.mxu0 0.0
    %1146 = vmatpush2.msra.mxu0 0.0
    %1147 = vmatprep.subr.mxu0 0.0
    %1148 = vmatpush2.msra.mxu0 0.0
    %1149 = vmatprep.subr.mxu0 0.0
    %1150 = vmatpush2.msra.mxu0 0.0
    %1151 = vmatprep.subr.mxu0 0.0
    %1152 = vmatpush2.msra.mxu0 0.0
    %1153 = vmatprep.subr.mxu0 0.0
    %1154 = vmatpush2.msra.mxu0 0.0
    %1155 = vmatprep.subr.mxu0 0.0
    %1156 = vmatpush2.msra.mxu0 0.0
    %1157 = vmatprep.subr.mxu0 0.0
    %1158 = vmatpush2.msra.mxu0 0.0
    %1159 = vmatprep.subr.mxu0 0.0
    %1160 = vmatpush2.msra.mxu0 0.0
    %1161 = vmatprep.subr.mxu0 0.0
    %1162 = vmatpush2.msra.mxu0 0.0
    %1163 = vmatprep.subr.mxu0 0.0
    %1164 = vmatpush2.msra.mxu0 0.0
    %1165 = vmatprep.mubr.f32.mxu0 0.0
    %1166 = vmatmul.mubr.f32.gmra.mxu0 %v1093
    %v1167 = vpop.f32.mrf.mxu0
    %v1168 = vadd.f32 0.0, %v1167
    %v1169 = vpop.f32.mrf.mxu0
    %v1170 = vadd.f32 0.0, %v1169
    %1171 = vmatprep.mubr.f32.mxu0 0.0
    %1172 = vmatmul.mubr.f32.gmra.mxu0 %v1094
    %v1173 = vpop.f32.mrf.mxu0
    %v1174 = vadd.f32 0.0, %v1173
    %v1175 = vpop.f32.mrf.mxu0
    %v1176 = vadd.f32 0.0, %v1175
    %1177 = vmatprep.mubr.f32.mxu0 0.0
    %1178 = vmatmul.mubr.f32.gmra.mxu0 %v1095
    %v1179 = vpop.f32.mrf.mxu0
    %v1180 = vadd.f32 0.0, %v1179
    %v1181 = vpop.f32.mrf.mxu0
    %v1182 = vadd.f32 0.0, %v1181
    %1183 = vmatprep.mubr.f32.mxu0 0.0
    %1184 = vmatmul.mubr.f32.gmra.mxu0 %v1096
    %v1185 = vpop.f32.mrf.mxu0
    %v1186 = vadd.f32 0.0, %v1185
    %v1187 = vpop.f32.mrf.mxu0
    %v1188 = vadd.f32 0.0, %v1187
    %1189 = vmatprep.mubr.f32.mxu0 0.0
    %1190 = vmatmul.mubr.f32.gmra.mxu0 %v1097
    %v1191 = vpop.f32.mrf.mxu0
    %v1192 = vadd.f32 0.0, %v1191
    %v1193 = vpop.f32.mrf.mxu0
    %v1194 = vadd.f32 0.0, %v1193
    %1195 = vmatprep.mubr.f32.mxu0 0.0
    %1196 = vmatmul.mubr.f32.gmra.mxu0 %v1098
    %v1197 = vpop.f32.mrf.mxu0
    %v1198 = vadd.f32 0.0, %v1197
    %v1199 = vpop.f32.mrf.mxu0
    %v1200 = vadd.f32 0.0, %v1199
    %1201 = vmatprep.mubr.f32.mxu0 0.0
    %1202 = vmatmul.mubr.f32.gmra.mxu0 %v1099
    %v1203 = vpop.f32.mrf.mxu0
    %v1204 = vadd.f32 0.0, %v1203
    %v1205 = vpop.f32.mrf.mxu0
    %v1206 = vadd.f32 0.0, %v1205
    %1207 = vmatprep.mubr.f32.mxu0 0.0
    %1208 = vmatmul.mubr.f32.gmra.mxu0 %v1100
    %v1209 = vpop.f32.mrf.mxu0
    %v1210 = vadd.f32 0.0, %v1209
    %v1211 = vpop.f32.mrf.mxu0
    %v1212 = vadd.f32 0.0, %v1211
    %1213 = vdwg.mxu0
    %1215 = vset.pattern.permute.xlu0 0
    %1216 = vperm.xlu0 %1215, %v1085
    %v1217 = vpop.permute.xlu0 %1216
    %1220 = vset.pattern.permute.xlu0 0
    %1221 = vperm.xlu0 %1220, %v1086
    %v1222 = vpop.permute.xlu0 %1221
    %1225 = vset.pattern.permute.xlu0 0
    %1226 = vperm.xlu0 %1225, %v1087
    %v1227 = vpop.permute.xlu0 %1226
    %1230 = vset.pattern.permute.xlu0 0
    %1231 = vperm.xlu0 %1230, %v1088
    %v1232 = vpop.permute.xlu0 %1231
    %1235 = vset.pattern.permute.xlu0 0
    %1236 = vperm.xlu0 %1235, %v1089
    %v1237 = vpop.permute.xlu0 %1236
    %1240 = vset.pattern.permute.xlu0 0
    %1241 = vperm.xlu0 %1240, %v1090
    %v1242 = vpop.permute.xlu0 %1241
    %1245 = vset.pattern.permute.xlu0 0
    %1246 = vperm.xlu0 %1245, %v1091
    %v1247 = vpop.permute.xlu0 %1246
    %1250 = vset.pattern.permute.xlu0 0
    %1251 = vperm.xlu0 %1250, %v1092
    %v1252 = vpop.permute.xlu0 %1251
    %v1255 = vsel %vm177, %v1077, 0
    %v1258 = vsel %vm177, %v1078, 0
    %v1261 = vsel %vm177, %v1079, 0
    %v1264 = vsel %vm177, %v1080, 0
    %v1267 = vsel %vm177, %v1081, 0
    %v1270 = vsel %vm177, %v1082, 0
    %v1273 = vsel %vm177, %v1083, 0
    %v1276 = vsel %vm177, %v1084, 0
    %1278 = vmatprep.subr.mxu0 0.0
    %1279 = vmatpush1.xpose.msra.mxu0 %v272
    %1280 = vmatprep.subr.mxu0 0.0
    %1281 = vmatpush1.xpose.msra.mxu0 %v269
    %1282 = vmatprep.subr.mxu0 0.0
    %1283 = vmatpush1.xpose.msra.mxu0 %v266
    %1284 = vmatprep.subr.mxu0 0.0
    %1285 = vmatpush1.xpose.msra.mxu0 %v263
    %1286 = vmatprep.subr.mxu0 0.0
    %1287 = vmatpush1.xpose.msra.mxu0 %v260
    %1288 = vmatprep.subr.mxu0 0.0
    %1289 = vmatpush1.xpose.msra.mxu0 %v257
    %1290 = vmatprep.subr.mxu0 0.0
    %1291 = vmatpush1.xpose.msra.mxu0 %v254
    %1292 = vmatprep.subr.mxu0 0.0
    %1293 = vmatpush1.xpose.msra.mxu0 %v251
    %1294 = vmatprep.subr.mxu0 0.0
    %1295 = vmatpush1.xpose.msra.mxu0 %v248
    %1296 = vmatprep.subr.mxu0 0.0
    %1297 = vmatpush1.xpose.msra.mxu0 %v245
    %1298 = vmatprep.subr.mxu0 0.0
    %1299 = vmatpush1.xpose.msra.mxu0 %v242
    %1300 = vmatprep.subr.mxu0 0.0
    %1301 = vmatpush1.xpose.msra.mxu0 %v239
    %1302 = vmatprep.subr.mxu0 0.0
    %1303 = vmatpush1.xpose.msra.mxu0 %v236
    %1304 = vmatprep.subr.mxu0 0.0
    %1305 = vmatpush1.xpose.msra.mxu0 %v233
    %1306 = vmatprep.subr.mxu0 0.0
    %1307 = vmatpush1.xpose.msra.mxu0 %v230
    %1308 = vmatprep.subr.mxu0 0.0
    %1309 = vmatpush1.xpose.msra.mxu0 %v227
    %1310 = vmatprep.subr.mxu0 0.0
    %1311 = vmatpush2.xpose.msra.mxu0 %v320
    %1312 = vmatprep.subr.mxu0 0.0
    %1313 = vmatpush2.xpose.msra.mxu0 %v317
    %1314 = vmatprep.subr.mxu0 0.0
    %1315 = vmatpush2.xpose.msra.mxu0 %v314
    %1316 = vmatprep.subr.mxu0 0.0
    %1317 = vmatpush2.xpose.msra.mxu0 %v311
    %1318 = vmatprep.subr.mxu0 0.0
    %1319 = vmatpush2.xpose.msra.mxu0 %v308
    %1320 = vmatprep.subr.mxu0 0.0
    %1321 = vmatpush2.xpose.msra.mxu0 %v305
    %1322 = vmatprep.subr.mxu0 0.0
    %1323 = vmatpush2.xpose.msra.mxu0 %v302
    %1324 = vmatprep.subr.mxu0 0.0
    %1325 = vmatpush2.xpose.msra.mxu0 %v299
    %1326 = vmatprep.subr.mxu0 0.0
    %1327 = vmatpush2.xpose.msra.mxu0 %v296
    %1328 = vmatprep.subr.mxu0 0.0
    %1329 = vmatpush2.xpose.msra.mxu0 %v293
    %1330 = vmatprep.subr.mxu0 0.0
    %1331 = vmatpush2.xpose.msra.mxu0 %v290
    %1332 = vmatprep.subr.mxu0 0.0
    %1333 = vmatpush2.xpose.msra.mxu0 %v287
    %1334 = vmatprep.subr.mxu0 0.0
    %1335 = vmatpush2.xpose.msra.mxu0 %v284
    %1336 = vmatprep.subr.mxu0 0.0
    %1337 = vmatpush2.xpose.msra.mxu0 %v281
    %1338 = vmatprep.subr.mxu0 0.0
    %1339 = vmatpush2.xpose.msra.mxu0 %v278
    %1340 = vmatprep.subr.mxu0 0.0
    %1341 = vmatpush2.xpose.msra.mxu0 %v275
    %1342 = vmatprep.mubr.f32.mxu0 0.0
    %1343 = vmatmul.mubr.f32.gmra.mxu0 %v1255
    %v1344 = vpop.f32.mrf.mxu0
    %v1345 = vadd.f32 %v1217, %v1344
    %v1346 = vpop.f32.mrf.mxu0
    %v1347 = vadd.f32 %v1217, %v1346
    %1348 = vmatprep.mubr.f32.mxu0 0.0
    %1349 = vmatmul.mubr.f32.gmra.mxu0 %v1258
    %v1350 = vpop.f32.mrf.mxu0
    %v1351 = vadd.f32 %v1222, %v1350
    %v1352 = vpop.f32.mrf.mxu0
    %v1353 = vadd.f32 %v1222, %v1352
    %1354 = vmatprep.mubr.f32.mxu0 0.0
    %1355 = vmatmul.mubr.f32.gmra.mxu0 %v1261
    %v1356 = vpop.f32.mrf.mxu0
    %v1357 = vadd.f32 %v1227, %v1356
    %v1358 = vpop.f32.mrf.mxu0
    %v1359 = vadd.f32 %v1227, %v1358
    %1360 = vmatprep.mubr.f32.mxu0 0.0
    %1361 = vmatmul.mubr.f32.gmra.mxu0 %v1264
    %v1362 = vpop.f32.mrf.mxu0
    %v1363 = vadd.f32 %v1232, %v1362
    %v1364 = vpop.f32.mrf.mxu0
    %v1365 = vadd.f32 %v1232, %v1364
    %1366 = vmatprep.mubr.f32.mxu0 0.0
    %1367 = vmatmul.mubr.f32.gmra.mxu0 %v1267
    %v1368 = vpop.f32.mrf.mxu0
    %v1369 = vadd.f32 %v1237, %v1368
    %v1370 = vpop.f32.mrf.mxu0
    %v1371 = vadd.f32 %v1237, %v1370
    %1372 = vmatprep.mubr.f32.mxu0 0.0
    %1373 = vmatmul.mubr.f32.gmra.mxu0 %v1270
    %v1374 = vpop.f32.mrf.mxu0
    %v1375 = vadd.f32 %v1242, %v1374
    %v1376 = vpop.f32.mrf.mxu0
    %v1377 = vadd.f32 %v1242, %v1376
    %1378 = vmatprep.mubr.f32.mxu0 0.0
    %1379 = vmatmul.mubr.f32.gmra.mxu0 %v1273
    %v1380 = vpop.f32.mrf.mxu0
    %v1381 = vadd.f32 %v1247, %v1380
    %v1382 = vpop.f32.mrf.mxu0
    %v1383 = vadd.f32 %v1247, %v1382
    %1384 = vmatprep.mubr.f32.mxu0 0.0
    %1385 = vmatmul.mubr.f32.gmra.mxu0 %v1276
    %v1386 = vpop.f32.mrf.mxu0
    %v1387 = vadd.f32 %v1252, %v1386
    %v1388 = vpop.f32.mrf.mxu0
    %v1389 = vadd.f32 %v1252, %v1388
    %1390 = vdwg.mxu0
    %v1391 = vadd.f32 %v1345, %v1168
    %v1392 = vadd.f32 %v1347, %v1170
    %v1393 = vadd.f32 %v1351, %v1174
    %v1394 = vadd.f32 %v1353, %v1176
    %v1395 = vadd.f32 %v1357, %v1180
    %v1396 = vadd.f32 %v1359, %v1182
    %v1397 = vadd.f32 %v1363, %v1186
    %v1398 = vadd.f32 %v1365, %v1188
    %v1399 = vadd.f32 %v1369, %v1192
    %v1400 = vadd.f32 %v1371, %v1194
    %v1401 = vadd.f32 %v1375, %v1198
    %v1402 = vadd.f32 %v1377, %v1200
    %v1403 = vadd.f32 %v1381, %v1204
    %v1404 = vadd.f32 %v1383, %v1206
    %v1405 = vadd.f32 %v1387, %v1210
    %v1406 = vadd.f32 %v1389, %v1212
    %v1407 = vmax.f32 %v1391, 0.0
    %v1408 = vmax.f32 %v1392, 0.0
    %v1409 = vmax.f32 %v1393, 0.0
    %v1410 = vmax.f32 %v1394, 0.0
    %v1411 = vmax.f32 %v1395, 0.0
    %v1412 = vmax.f32 %v1396, 0.0
    %v1413 = vmax.f32 %v1397, 0.0
    %v1414 = vmax.f32 %v1398, 0.0
    %v1415 = vmax.f32 %v1399, 0.0
    %v1416 = vmax.f32 %v1400, 0.0
    %v1417 = vmax.f32 %v1401, 0.0
    %v1418 = vmax.f32 %v1402, 0.0
    %v1419 = vmax.f32 %v1403, 0.0
    %v1420 = vmax.f32 %v1404, 0.0
    %v1421 = vmax.f32 %v1405, 0.0
    %v1422 = vmax.f32 %v1406, 0.0
    %1423 = vst [vmem:[#allocation2] sm:$0xff] %v1407
    %1424 = vst [vmem:[#allocation2 + $0x8] sm:$0xff] %v1408
    %1425 = vst [vmem:[#allocation2 + $0x10] sm:$0xff] %v1409
    %1426 = vst [vmem:[#allocation2 + $0x18] sm:$0xff] %v1410
    %1427 = vst [vmem:[#allocation2 + $0x20] sm:$0xff] %v1411
    %1428 = vst [vmem:[#allocation2 + $0x28] sm:$0xff] %v1412
    %1429 = vst [vmem:[#allocation2 + $0x30] sm:$0xff] %v1413
    %1430 = vst [vmem:[#allocation2 + $0x38] sm:$0xff] %v1414
    %1431 = vst [vmem:[#allocation2 + $0x40] sm:$0xff] %v1415
    %1432 = vst [vmem:[#allocation2 + $0x48] sm:$0xff] %v1416
    %1433 = vst [vmem:[#allocation2 + $0x50] sm:$0xff] %v1417
    %1434 = vst [vmem:[#allocation2 + $0x58] sm:$0xff] %v1418
    %1435 = vst [vmem:[#allocation2 + $0x60] sm:$0xff] %v1419
    %1436 = vst [vmem:[#allocation2 + $0x68] sm:$0xff] %v1420
    %1437 = vst [vmem:[#allocation2 + $0x70] sm:$0xff] %v1421
    %1438 = vst [vmem:[#allocation2 + $0x78] sm:$0xff] %v1422
    // Predicated region
    $region38: #{tpu_custom_call.1} parent=1 // pred_check
      _
    $region39: #{tpu_custom_call.1} parent=1 // pred_check_branch
      %1440 = sbr.rel (0) target = $region41
    $region40: #{tpu_custom_call.1} parent=1 // pred_region
      %s1442 = ssub.s32 2048, 2048
      %1443 = vsyncadd [#allocation3], %s1442
      %s1444 = sshll.u32 [#allocation2], 4
      %s1445 = int_to_ptr.vmem [resolvable:$true] %s1444
      %1450 = dma.vmem_to_hbm [thread:$0]  %s1445, 2048, %s9, [#allocation3], 256, 256, 16
    $region41: #{tpu_custom_call.1} parent=1 // pred_fallthru
      _
    // Predicated region
    $region42: #{tpu_custom_call.1} parent=1 // pred_check
      _
    $region43: #{tpu_custom_call.1} parent=1 // pred_check_branch
      %1452 = sbr.rel (0) target = $region45
    $region44: #{tpu_custom_call.1} parent=1 // pred_region
      %1453 = dma.done [#allocation3], 2048
    $region45: #{tpu_custom_call.1} parent=1 // pred_fallthru
      _
    %1454 = vsyncpa [#allocation3], 1

</llo_original>
